<compile_context>
chip_gen: v5e
topology: v5e:2x2
jax: 0.10.0
libtpu: 0.0.40
codegen_flags: <defaults>
</compile_context>

<pallas_src>
import functools

import jax
import jax.numpy as jnp
from jax import lax
from jax.experimental import pallas as pl
from jax.experimental.pallas import tpu as pltpu


def _round_up(n: int, m: int) -> int:
    return ((n + m - 1) // m) * m


def _sigmoid_eup(x):
    # sigmoid(x) == 0.5 * tanh(0.5 * x) + 0.5 ; tanh runs on the EUP slot.
    return 0.5 * jnp.tanh(0.5 * x) + 0.5


def _autoencoder2_kernel(x_ref, w_enc_ref, b_enc_ref, w_dec_ref, b_dec_ref, o_ref):
    # x_ref:     (TB,  H1)  f32   (unpadded features; cast to bf16 here, in VMEM)
    # w_enc_ref: (H1,  H2p) bf16  (pre-transposed; latent columns >= H2 are zero)
    # b_enc_ref: (1,   H2p) f32   (padded entries are zero)
    # w_dec_ref: (H2p, H1)  bf16  (pre-transposed; latent rows >= H2 are zero)
    # b_dec_ref: (1,   H1)  f32
    x = x_ref[...].astype(jnp.bfloat16)

    # Encoder: z2 = sigmoid(x @ W_enc^T + b_enc), canonical [M,K]x[K,N] contraction.
    pre1 = lax.dot_general(
        x, w_enc_ref[...],
        dimension_numbers=(((1,), (0,)), ((), ())),
        preferred_element_type=jnp.float32,
    ) + b_enc_ref[...]
    # Padded latent columns: pre1 == 0 -> z2 == 0.5, but they hit zero rows of
    # w_dec below, so they contribute nothing.
    z2 = _sigmoid_eup(pre1)                                   # (TB, H2p) f32

    # Decoder: out = sigmoid(z2 @ W_dec^T + b_dec)
    pre2 = lax.dot_general(
        z2.astype(jnp.bfloat16), w_dec_ref[...],
        dimension_numbers=(((1,), (0,)), ((), ())),
        preferred_element_type=jnp.float32,
    ) + b_dec_ref[...]
    o_ref[...] = _sigmoid_eup(pre2).astype(o_ref.dtype)       # (TB, H1)


@functools.partial(jax.jit, static_argnames=("block_b",))
def autoencoder2_forward(x, w_enc, b_enc, w_dec, b_dec, *, block_b=1024):
    """x: (B, H1); w_enc: (H2, H1); b_enc: (H2,); w_dec: (H1, H2); b_dec: (H1,)."""
    B, H1 = x.shape
    H2 = w_enc.shape[0]

    LANE, SUBLANE = 128, 8
    H2p = _round_up(H2, LANE)      # latent dim lives only in VMEM -> pad it freely

    # Batch tile: sublane-aligned, capped at block_b, and capped at ceil(B/2)
    # (rounded to sublanes) so the grid has >=2 steps whenever B > 8, letting
    # "parallel" shard the batch over both TensorCores on v7x.
    B_aligned = _round_up(B, SUBLANE)
    tb_half = _round_up(pl.cdiv(B_aligned, 2), SUBLANE)
    TB = max(SUBLANE, min(_round_up(block_b, SUBLANE), tb_half))
    Bp = _round_up(B, TB)
    grid = (Bp // TB,)

    # Only the batch dim of x may need (cheap) zero-padding; features stay unpadded
    # and the dtype is untouched (cast happens in-kernel).
    x_in = x if Bp == B else jnp.pad(x, ((0, Bp - B), (0, 0)))

    # Tiny weights/biases: pad latent dim, pre-transpose to (K, N), cast to bf16.
    w_enc_t = jnp.pad(w_enc, ((0, H2p - H2), (0, 0))).T.astype(jnp.bfloat16)   # (H1, H2p)
    b_enc_p = jnp.pad(b_enc, (0, H2p - H2)).reshape(1, H2p).astype(jnp.float32)
    w_dec_t = jnp.pad(w_dec, ((0, 0), (0, H2p - H2))).T.astype(jnp.bfloat16)   # (H2p, H1)
    b_dec_r = b_dec.reshape(1, H1).astype(jnp.float32)

    # Explicit, portable VMEM budget (assume Pallas double-buffers everything,
    # including constant-index blocks), with headroom; capped at 32 MiB so it is
    # safe on v7x's 64 MiB-per-TC VMEM.
    vmem_bytes = (
        2 * 2 * (H1 * H2p + H2p * H1)        # bf16 weights, double-buffered
        + 2 * 4 * (H2p + H1)                 # f32 biases, double-buffered
        + 2 * TB * H1 * 4                    # x double buffer (f32)
        + 2 * TB * H1 * 4                    # out double buffer (f32)
        + TB * H2p * (4 + 2 + 4)             # pre1 f32 + z2 bf16 + f32 temps
    )
    vmem_limit = min(32 * 1024 * 1024, max(4 * vmem_bytes, 1 * 1024 * 1024))

    flops = 2 * Bp * (H1 * H2p + H2p * H1)
    transcendentals = Bp * (H2p + H1)        # two sigmoids (tanh on EUP)
    bytes_accessed = (
        Bp * H1 * 4                           # x read (f32, unpadded)
        + w_enc_t.size * 2 + w_dec_t.size * 2
        + b_enc_p.size * 4 + b_dec_r.size * 4
        + Bp * H1 * 4                         # out write (f32, unpadded)
    )

    out_p = pl.pallas_call(
        _autoencoder2_kernel,
        out_shape=jax.ShapeDtypeStruct((Bp, H1), x.dtype),
        grid=grid,
        in_specs=[
            pl.BlockSpec((TB, H1), lambda i: (i, 0)),      # x: tiled over batch, full feature dim
            pl.BlockSpec((H1, H2p), lambda i: (0, 0)),     # weights/biases resident
            pl.BlockSpec((1, H2p), lambda i: (0, 0)),
            pl.BlockSpec((H2p, H1), lambda i: (0, 0)),
            pl.BlockSpec((1, H1), lambda i: (0, 0)),
        ],
        out_specs=pl.BlockSpec((TB, H1), lambda i: (i, 0)),
        compiler_params=pltpu.CompilerParams(
            dimension_semantics=("parallel",),             # v7x: shard batch over 2 TCs
            vmem_limit_bytes=vmem_limit,
        ),
        cost_estimate=pl.CostEstimate(
            flops=flops,
            transcendentals=transcendentals,
            bytes_accessed=bytes_accessed,
        ),
    )(x_in, w_enc_t, b_enc_p, w_dec_t, b_dec_r)

    return out_p if Bp == B else out_p[:B]


def _reference_forward(x, w_enc, b_enc, w_dec, b_dec):
    z2 = jax.nn.sigmoid(x @ w_enc.T + b_enc)
    return jax.nn.sigmoid(z2 @ w_dec.T + b_dec)


if __name__ == "__main__":
    # Small shapes consistent with the module: h1=32 input features, h2=16 latent.
    B, H1, H2 = 8, 32, 16

    key = jax.random.PRNGKey(0)
    k_x, k_we, k_be, k_wd, k_bd = jax.random.split(key, 5)

    x = jax.random.normal(k_x, (B, H1), dtype=jnp.float32)
    # Init mimicking nn.Linear's uniform(-1/sqrt(fan_in), 1/sqrt(fan_in)).
    bound_enc = 1.0 / jnp.sqrt(jnp.float32(H1))
    bound_dec = 1.0 / jnp.sqrt(jnp.float32(H2))
    w_enc = jax.random.uniform(k_we, (H2, H1), jnp.float32, -bound_enc, bound_enc)
    b_enc = jax.random.uniform(k_be, (H2,), jnp.float32, -bound_enc, bound_enc)
    w_dec = jax.random.uniform(k_wd, (H1, H2), jnp.float32, -bound_dec, bound_dec)
    b_dec = jax.random.uniform(k_bd, (H1,), jnp.float32, -bound_dec, bound_dec)

    out = autoencoder2_forward(x, w_enc, b_enc, w_dec, b_dec)
    out = jax.block_until_ready(out)

    # f32 reference; kernel uses bf16 MXU operands with f32 accumulation,
    # so compare with a tolerance that covers bf16 operand rounding.
    ref = _reference_forward(x, w_enc, b_enc, w_dec, b_dec)
    assert out.shape == (B, H1)
    assert jnp.allclose(out, ref, atol=2e-2, rtol=2e-2), float(jnp.max(jnp.abs(out - ref)))

    print("KERNEL_OK")
</pallas_src>

<mosaic_0001>
module attributes {stable_mosaic.version = 11 : i64} {
  func.func @_autoencoder2_kernel(%arg0: i32, %arg1: memref<8x32xf32, #tpu.memory_space<vmem>>, %arg2: memref<32x128xbf16, #tpu.memory_space<vmem>>, %arg3: memref<1x128xf32, #tpu.memory_space<vmem>>, %arg4: memref<128x32xbf16, #tpu.memory_space<vmem>>, %arg5: memref<1x32xf32, #tpu.memory_space<vmem>>, %arg6: memref<8x32xf32, #tpu.memory_space<vmem>>) attributes {dimension_semantics = [#tpu.dimension_semantics<parallel>], iteration_bounds = array<i64: 1>, scalar_prefetch = 0 : i64, scratch_operands = 0 : i64, tpu.core_type = #tpu.core_type<tc>, window_params = [{transform_indices = @transform_0, window_bounds = array<i64: 8, 32>}, {pipeline_mode = #tpu.pipeline_mode<synchronous>, transform_indices = @transform_1, window_bounds = array<i64: 32, 128>}, {pipeline_mode = #tpu.pipeline_mode<synchronous>, transform_indices = @transform_2, window_bounds = array<i64: 1, 128>}, {pipeline_mode = #tpu.pipeline_mode<synchronous>, transform_indices = @transform_3, window_bounds = array<i64: 128, 32>}, {pipeline_mode = #tpu.pipeline_mode<synchronous>, transform_indices = @transform_4, window_bounds = array<i64: 1, 32>}, {transform_indices = @transform_5, window_bounds = array<i64: 8, 32>}]} {
    %c0 = arith.constant 0 : index
    %c0_0 = arith.constant 0 : index
    %0 = vector.load %arg1[%c0, %c0_0] : memref<8x32xf32, #tpu.memory_space<vmem>>, vector<8x32xf32>
    %1 = arith.truncf %0 : vector<8x32xf32> to vector<8x32xbf16>
    %c0_1 = arith.constant 0 : index
    %c0_2 = arith.constant 0 : index
    %2 = vector.load %arg2[%c0_1, %c0_2] : memref<32x128xbf16, #tpu.memory_space<vmem>>, vector<32x128xbf16>
    %cst = arith.constant dense<0.000000e+00> : vector<8x128xf32>
    %3 = tpu.matmul %1, %2, %cst {dimension_numbers = #tpu.dot_dimension_numbers<[1], [0], [0], [1], [0, 0, 1, 1], [], []>} : vector<8x32xbf16>, vector<32x128xbf16>, vector<8x128xf32> -> vector<8x128xf32>
    %c0_3 = arith.constant 0 : index
    %c0_4 = arith.constant 0 : index
    %4 = vector.load %arg3[%c0_3, %c0_4] : memref<1x128xf32, #tpu.memory_space<vmem>>, vector<1x128xf32>
    %5 = vector.broadcast %4 : vector<1x128xf32> to vector<8x128xf32>
    %6 = arith.addf %3, %5 : vector<8x128xf32>
    %cst_5 = arith.constant 5.000000e-01 : f32
    %7 = vector.broadcast %cst_5 : f32 to vector<8x128xf32>
    %8 = arith.mulf %7, %6 : vector<8x128xf32>
    %9 = math.tanh %8 : vector<8x128xf32>
    %cst_6 = arith.constant 5.000000e-01 : f32
    %10 = vector.broadcast %cst_6 : f32 to vector<8x128xf32>
    %11 = arith.mulf %10, %9 : vector<8x128xf32>
    %cst_7 = arith.constant 5.000000e-01 : f32
    %12 = vector.broadcast %cst_7 : f32 to vector<8x128xf32>
    %13 = arith.addf %11, %12 : vector<8x128xf32>
    %14 = arith.truncf %13 : vector<8x128xf32> to vector<8x128xbf16>
    %c0_8 = arith.constant 0 : index
    %c0_9 = arith.constant 0 : index
    %15 = vector.load %arg4[%c0_8, %c0_9] : memref<128x32xbf16, #tpu.memory_space<vmem>>, vector<128x32xbf16>
    %cst_10 = arith.constant dense<0.000000e+00> : vector<8x32xf32>
    %16 = tpu.matmul %14, %15, %cst_10 {dimension_numbers = #tpu.dot_dimension_numbers<[1], [0], [0], [1], [0, 0, 1, 1], [], []>} : vector<8x128xbf16>, vector<128x32xbf16>, vector<8x32xf32> -> vector<8x32xf32>
    %c0_11 = arith.constant 0 : index
    %c0_12 = arith.constant 0 : index
    %17 = vector.load %arg5[%c0_11, %c0_12] : memref<1x32xf32, #tpu.memory_space<vmem>>, vector<1x32xf32>
    %18 = vector.broadcast %17 : vector<1x32xf32> to vector<8x32xf32>
    %19 = arith.addf %16, %18 : vector<8x32xf32>
    %cst_13 = arith.constant 5.000000e-01 : f32
    %20 = vector.broadcast %cst_13 : f32 to vector<8x32xf32>
    %21 = arith.mulf %20, %19 : vector<8x32xf32>
    %22 = math.tanh %21 : vector<8x32xf32>
    %cst_14 = arith.constant 5.000000e-01 : f32
    %23 = vector.broadcast %cst_14 : f32 to vector<8x32xf32>
    %24 = arith.mulf %23, %22 : vector<8x32xf32>
    %cst_15 = arith.constant 5.000000e-01 : f32
    %25 = vector.broadcast %cst_15 : f32 to vector<8x32xf32>
    %26 = arith.addf %24, %25 : vector<8x32xf32>
    %c0_16 = arith.constant 0 : index
    %c0_17 = arith.constant 0 : index
    %27 = vector.load %arg6[%c0_16, %c0_17] : memref<8x32xf32, #tpu.memory_space<vmem>>, vector<8x32xf32>
    tpu.vector_store %arg6[%c0_16, %c0_17], %26 {strides = array<i32>} : memref<8x32xf32, #tpu.memory_space<vmem>>, vector<8x32xf32>,
    return
  }
  func.func @transform_0(%arg0: i32) -> (i32, i32) {
    %c0_i32 = arith.constant 0 : i32
    %c0_i32_0 = arith.constant 0 : i32
    return %arg0, %c0_i32 : i32, i32
  }
  func.func @transform_1(%arg0: i32) -> (i32, i32) {
    %c0_i32 = arith.constant 0 : i32
    %c0_i32_0 = arith.constant 0 : i32
    %c0_i32_1 = arith.constant 0 : i32
    return %c0_i32, %c0_i32_0 : i32, i32
  }
  func.func @transform_2(%arg0: i32) -> (i32, i32) {
    %c0_i32 = arith.constant 0 : i32
    %c0_i32_0 = arith.constant 0 : i32
    %c0_i32_1 = arith.constant 0 : i32
    return %c0_i32, %c0_i32_0 : i32, i32
  }
  func.func @transform_3(%arg0: i32) -> (i32, i32) {
    %c0_i32 = arith.constant 0 : i32
    %c0_i32_0 = arith.constant 0 : i32
    %c0_i32_1 = arith.constant 0 : i32
    return %c0_i32, %c0_i32_0 : i32, i32
  }
  func.func @transform_4(%arg0: i32) -> (i32, i32) {
    %c0_i32 = arith.constant 0 : i32
    %c0_i32_0 = arith.constant 0 : i32
    %c0_i32_1 = arith.constant 0 : i32
    return %c0_i32, %c0_i32_0 : i32, i32
  }
  func.func @transform_5(%arg0: i32) -> (i32, i32) {
    %c0_i32 = arith.constant 0 : i32
    %c0_i32_0 = arith.constant 0 : i32
    return %arg0, %c0_i32 : i32, i32
  }
}

</mosaic_0001>

<llo_original>
// kernel: autoencoder2_forward.1
$region0: #{autoencoder2_forward.1}
  #allocation0 [shape = 'u32[]', space=smem, size = 0x4, offset = 0x4, fixed_abs, tag = 'smem constant byte address 0x4 - core index']
  #allocation1 [shape = 'u32[72,128]{1,0:T(1,128)}', space=vmem, size = 0x9000, scoped, tag = 'internal scratch']
  %s0 = inlined_call_operand.vmem [shape: f32[8,32], index: 0, kind: input, shape index: {}]
  %s1 = inlined_call_operand.vmem [shape: bf16[32,128], index: 1, kind: input, shape index: {}]
  %s2 = inlined_call_operand.vmem [shape: f32[1,128], index: 2, kind: input, shape index: {}]
  %s3 = inlined_call_operand.vmem [shape: bf16[128,32], index: 3, kind: input, shape index: {}]
  %s4 = inlined_call_operand.vmem [shape: f32[1,32], index: 4, kind: input, shape index: {}]
  %s5 = inlined_call_operand.hbm [shape: f32[8,32], index: 5, kind: output, shape index: {}]
  %s6 = sld [smem:[#allocation0]]
  $region30: #{autoencoder2_forward.1} parent=0
    _
  %s8 = ssub.s32 1, %s6
  %s9 = scalar_select 0, %s8, %s6
  $region1: #{autoencoder2_forward.1} parent=0
    #allocation2 [shape = 'u8[4096]{0}', space=vmem, size = 0x1000, scoped, tag = 'output window, operand 0, single buffered']
    #allocation3 [shape = 's32[1]{0}', space=sflag, size = 0x4, scoped, tag = 'scoped memory for autoencoder2_forward.1']
    %10 = vsyncpa [#allocation3], 0
    // Predicated region
    $region2: #{autoencoder2_forward.1} parent=1 // pred_check
      _
    $region3: #{autoencoder2_forward.1} parent=1 // pred_check_branch
      %12 = sbr.rel (0) target = $region5
    $region4: #{autoencoder2_forward.1} parent=1 // pred_region
      _
    $region5: #{autoencoder2_forward.1} parent=1 // pred_fallthru
      _
    // Predicated region
    $region6: #{autoencoder2_forward.1} parent=1 // pred_check
      _
    $region7: #{autoencoder2_forward.1} parent=1 // pred_check_branch
      %14 = sbr.rel (0) target = $region9
    $region8: #{autoencoder2_forward.1} parent=1 // pred_region
      _
    $region9: #{autoencoder2_forward.1} parent=1 // pred_fallthru
      _
    // Predicated region
    $region10: #{autoencoder2_forward.1} parent=1 // pred_check
      _
    $region11: #{autoencoder2_forward.1} parent=1 // pred_check_branch
      %16 = sbr.rel (0) target = $region13
    $region12: #{autoencoder2_forward.1} parent=1 // pred_region
      _
    $region13: #{autoencoder2_forward.1} parent=1 // pred_fallthru
      _
    // Predicated region
    $region14: #{autoencoder2_forward.1} parent=1 // pred_check
      _
    $region15: #{autoencoder2_forward.1} parent=1 // pred_check_branch
      %18 = sbr.rel (0) target = $region17
    $region16: #{autoencoder2_forward.1} parent=1 // pred_region
      _
    $region17: #{autoencoder2_forward.1} parent=1 // pred_fallthru
      _
    // Predicated region
    $region18: #{autoencoder2_forward.1} parent=1 // pred_check
      _
    $region19: #{autoencoder2_forward.1} parent=1 // pred_check_branch
      %20 = sbr.rel (0) target = $region21
    $region20: #{autoencoder2_forward.1} parent=1 // pred_region
      _
    $region21: #{autoencoder2_forward.1} parent=1 // pred_fallthru
      _
    %v22 = vld [vmem:[%s0] sm:$0xff]
    %v23 = vpack.c.bf16 %v22, %v22
    %v24 = vld [vmem:[%s1] sm:$0xf]
    %v25 = vld [vmem:[%s1 + $0x4] sm:$0xf]
    %v26 = vld [vmem:[%s1 + $0x8] sm:$0xf]
    %v27 = vld [vmem:[%s1 + $0xc] sm:$0xf]
    %v28 = vld [vmem:[%s2] sm:$0x1]
    %v30 = vperm.slane %v28, 0
    %v36 = vunpack.c.l.b16 %v24
    %v37 = vunpack.c.l.b16 %v25
    %v38 = vunpack.c.l.b16 %v26
    %v39 = vunpack.c.l.b16 %v27
    %v40 = vpack.c.b16 %v37, %v36
    %v41 = vpack.c.b16 %v39, %v38
    %vm44 = vcmask 261120
    %v46 = vsel %vm44, %v23, 0
    %48 = vmatpush.bf16.msra.mxu0 0
    %49 = vmatpush.bf16.msra.mxu0 0
    %50 = vmatpush.bf16.msra.mxu0 0
    %51 = vmatpush.bf16.msra.mxu0 0
    %52 = vmatpush.bf16.msra.mxu0 0
    %53 = vmatpush.bf16.msra.mxu0 0
    %54 = vmatpush.bf16.msra.mxu0 %v41
    %55 = vmatpush.bf16.msra.mxu0 %v40
    %56 = vmatmul.bf16.gmra.mxu0 %v46
    %v57 = vpop.f32.mrf.mxu0
    %v58 = vadd.f32 %v30, %v57
    %v59 = vpop.f32.mrf.mxu0
    %60 = vdwg.mxu0
    %v61 = vmul.f32 %v58, 0.5
    %v62 = vtanh.pop %v61
    %v63 = vmul.f32 %v62, 0.5
    %v64 = vadd.f32 %v63, 0.5
    %v65 = vpack.c.bf16 %v64, %v64
    %v66 = vld [vmem:[%s3] sm:$0xf]
    %v67 = vld [vmem:[%s3 + $0x4] sm:$0xf]
    %v68 = vld [vmem:[%s3 + $0x8] sm:$0xf]
    %v69 = vld [vmem:[%s3 + $0xc] sm:$0xf]
    %v70 = vld [vmem:[%s3 + $0x10] sm:$0xf]
    %v71 = vld [vmem:[%s3 + $0x14] sm:$0xf]
    %v72 = vld [vmem:[%s3 + $0x18] sm:$0xf]
    %v73 = vld [vmem:[%s3 + $0x1c] sm:$0xf]
    %v74 = vld [vmem:[%s3 + $0x20] sm:$0xf]
    %v75 = vld [vmem:[%s3 + $0x24] sm:$0xf]
    %v76 = vld [vmem:[%s3 + $0x28] sm:$0xf]
    %v77 = vld [vmem:[%s3 + $0x2c] sm:$0xf]
    %v78 = vld [vmem:[%s3 + $0x30] sm:$0xf]
    %v79 = vld [vmem:[%s3 + $0x34] sm:$0xf]
    %v80 = vld [vmem:[%s3 + $0x38] sm:$0xf]
    %v81 = vld [vmem:[%s3 + $0x3c] sm:$0xf]
    %v82 = vld [vmem:[%s4] sm:$0x1]
    %v84 = vperm.slane %v82, 0
    %v102 = vunpack.c.l.b16 %v66
    %v103 = vunpack.c.l.b16 %v67
    %v104 = vunpack.c.l.b16 %v68
    %v105 = vunpack.c.l.b16 %v69
    %v106 = vunpack.c.l.b16 %v70
    %v107 = vunpack.c.l.b16 %v71
    %v108 = vunpack.c.l.b16 %v72
    %v109 = vunpack.c.l.b16 %v73
    %v110 = vunpack.c.l.b16 %v74
    %v111 = vunpack.c.l.b16 %v75
    %v112 = vunpack.c.l.b16 %v76
    %v113 = vunpack.c.l.b16 %v77
    %v114 = vunpack.c.l.b16 %v78
    %v115 = vunpack.c.l.b16 %v79
    %v116 = vunpack.c.l.b16 %v80
    %v117 = vunpack.c.l.b16 %v81
    %v118 = vpack.c.b16 %v103, %v102
    %v119 = vpack.c.b16 %v105, %v104
    %v120 = vpack.c.b16 %v107, %v106
    %v121 = vpack.c.b16 %v109, %v108
    %v122 = vpack.c.b16 %v111, %v110
    %v123 = vpack.c.b16 %v113, %v112
    %v124 = vpack.c.b16 %v115, %v114
    %v125 = vpack.c.b16 %v117, %v116
    %134 = vmatpush.bf16.msra.mxu0 %v125
    %135 = vmatpush.bf16.msra.mxu0 %v124
    %136 = vmatpush.bf16.msra.mxu0 %v123
    %137 = vmatpush.bf16.msra.mxu0 %v122
    %138 = vmatpush.bf16.msra.mxu0 %v121
    %139 = vmatpush.bf16.msra.mxu0 %v120
    %140 = vmatpush.bf16.msra.mxu0 %v119
    %141 = vmatpush.bf16.msra.mxu0 %v118
    %142 = vmatmul.bf16.gmra.mxu0 %v65
    %v143 = vpop.f32.mrf.mxu0
    %v144 = vadd.f32 %v84, %v143
    %v145 = vpop.f32.mrf.mxu0
    %146 = vdwg.mxu0
    %v147 = vmul.f32 %v144, 0.5
    %v148 = vtanh.pop %v147
    %v149 = vmul.f32 %v148, 0.5
    %v150 = vadd.f32 %v149, 0.5
    %151 = vst.msk [vmem:[#allocation2] sm:$0xff] %vm44, %v150
    // Predicated region
    $region22: #{autoencoder2_forward.1} parent=1 // pred_check
      _
    $region23: #{autoencoder2_forward.1} parent=1 // pred_check_branch
      %153 = sbr.rel (0) target = $region25
    $region24: #{autoencoder2_forward.1} parent=1 // pred_region
      %155 = vsyncadd [#allocation3], 0
      %s157 = sshll.u32 [#allocation2], 4
      %s158 = int_to_ptr.vmem [resolvable:$true] %s157
      %s159 = sshll.u32 %s5, 4
      %s160 = int_to_ptr.hbm [resolvable:$true] %s159
      %162 = dma.vmem_to_hbm [thread:$0]  %s158, 128, %s160, [#allocation3]
    $region25: #{autoencoder2_forward.1} parent=1 // pred_fallthru
      _
    // Predicated region
    $region26: #{autoencoder2_forward.1} parent=1 // pred_check
      _
    $region27: #{autoencoder2_forward.1} parent=1 // pred_check_branch
      %164 = sbr.rel (0) target = $region29
    $region28: #{autoencoder2_forward.1} parent=1 // pred_region
      %166 = dma.done [#allocation3], 128
    $region29: #{autoencoder2_forward.1} parent=1 // pred_fallthru
      _
    %167 = vsyncpa [#allocation3], 1

</llo_original>
